<compile_context>
chip_gen: v7x
topology: tpu7x:2x2x1
jax: 0.10.0
libtpu: 0.0.40
codegen_flags: <defaults>
</compile_context>

<pallas_src>
import jax
import jax.numpy as jnp
from jax.experimental import pallas as pl
from jax.experimental.pallas import tpu as pltpu


# --------------------------------------------------------------------------
# Tiling / budget helpers
# --------------------------------------------------------------------------
def _round_up(x: int, m: int) -> int:
    return ((x + m - 1) // m) * m


def _vmem_budget_and_limit() -> tuple:
    """(tile-sizing budget, vmem_limit_bytes) derived per TPU generation."""
    phys = 128 * 1024 * 1024
    try:
        info = pltpu.get_tpu_info()
        phys = getattr(info, "vmem_capacity_bytes", phys) or phys
    except Exception:
        pass
    if phys >= 96 * 1024 * 1024:
        # v5e / v6e: 128 MiB physical VMEM -> generous scoped limit.
        limit = 56 * 1024 * 1024
    else:
        # v7x: 64 MiB physical VMEM per core -> stay well under the ceiling.
        limit = 26 * 1024 * 1024
    budget = (limit * 9) // 10  # headroom for pipeline bookkeeping
    return budget, limit


def _choose_row_tile(n_rows: int, d: int, n_mod: int, itemsize: int,
                     budget_bytes: int) -> int:
    """Pick the row tile TL for the collapsed (R, D) -> (R, N*D) copy.

    Footprint per tile row (conservative: assumes the auto-pipelined path,
    default double buffering of every block, lane-padded widths):
        2 * (N * d_pad + out_pad) * itemsize
    The manual-DMA path uses about half of this (no input blocks), so it
    always has extra headroom under the same TL.
    """
    sub = max(8, 32 // itemsize)          # sublane multiple: 8 f32 / 16 bf16 / 32 i8
    d_pad = _round_up(d, 128)             # lane padding of each input block
    out_pad = _round_up(n_mod * d, 128)   # lane padding of the output block
    bytes_per_row = 2 * (n_mod * d_pad + out_pad) * itemsize

    tl = budget_bytes // max(bytes_per_row, 1)
    tl = max(sub, (tl // sub) * sub)
    tl = min(tl, 1024)                    # BW saturates around 512-1024 rows
    # Keep >= ~8 grid steps so both v7x TensorCores get work and the software
    # pipeline has prefetch/writeback to overlap.
    tl = min(tl, max(sub, _round_up(-(-n_rows // 8), sub)))
    # Never exceed the (sublane-rounded) total row count.
    tl = min(tl, _round_up(n_rows, sub))
    return tl


# --------------------------------------------------------------------------
# Kernels
# --------------------------------------------------------------------------
def _concat_copy_kernel(*refs):
    """Auto-pipelined path (lane-aligned D, ragged row count).

    refs = (mod_0_ref, ..., mod_{N-1}_ref, out_ref)
    Each modality ref is a (TL, D) VMEM block; out_ref is (TL, N*D).
    D % 128 == 0, so every slice store is an unmasked full-lane vst.
    """
    mod_refs, out_ref = refs[:-1], refs[-1]
    d = mod_refs[0].shape[-1]
    for i, m_ref in enumerate(mod_refs):
        out_ref[:, i * d:(i + 1) * d] = m_ref[...]


def _make_dma_concat_kernel(n_mod: int, tl: int, d: int):
    """Manual-DMA path (lane-aligned D, TL divides R).

    Inputs are raw HBM refs (memory_space=pl.ANY); each modality's (TL, D)
    row window is DMA'd directly into its 128-aligned lane slice of the
    (TL, N*D) output VMEM block.  No input VMEM blocks, no vreg round trip —
    per-step VMEM footprint is just the output block, and the kernel body is
    a pure DMA stream.
    """
    def kernel(*refs):
        mod_hbm = refs[:n_mod]
        out_ref = refs[n_mod]
        sem = refs[n_mod + 1]

        row0 = pl.multiple_of(pl.program_id(0) * tl, 8)
        copies = []
        for i in range(n_mod):
            cp = pltpu.make_async_copy(
                mod_hbm[i].at[pl.ds(row0, tl), :],
                out_ref.at[:, pl.ds(i * d, d)],
                sem.at[i],
            )
            cp.start()
            copies.append(cp)
        for cp in copies:
            cp.wait()

    return kernel


# --------------------------------------------------------------------------
# Module wrapper
# --------------------------------------------------------------------------
class BaseFuserPallas:
    """JAX/Pallas equivalent of slp BaseFuser with concatenation fuse()."""

    def __init__(self, feature_size: int, n_modalities: int, **extra_kwargs):
        self.feature_size = feature_size
        self.n_modalities = n_modalities
        # No learnable parameters in BaseFuser / concat fusion.

    @property
    def out_size(self) -> int:
        return self.feature_size * self.n_modalities

    def fuse(self, *mods, lengths=None):
        # NOTE: `lengths` is accepted for API parity but unused — plain
        # concatenation does not mask padded positions (matches reference).
        assert len(mods) == self.n_modalities
        B, L, D = mods[0].shape
        dtype = mods[0].dtype
        for m in mods:
            assert m.shape == (B, L, D), "all modalities must share [B, L, D]"
            assert m.dtype == dtype, "all modalities must share a dtype"
        assert D == self.feature_size

        n = self.n_modalities
        nd = n * D

        # Non-lane-aligned feature size: per-modality offsets i*D would force
        # masked vst.msk partial stores and lane-sparse DMAs; for tiny D the
        # Pallas kernel is pure overhead versus XLA's native concat.
        if D % 128 != 0:
            return jnp.concatenate(mods, axis=-1)

        itemsize = jnp.dtype(dtype).itemsize
        rows = B * L
        budget, vmem_limit = _vmem_budget_and_limit()
        tl = _choose_row_tile(rows, D, n, itemsize, budget)

        # Collapse batch & sequence (layout-preserving for row-major).
        mods2d = [m.reshape(rows, D) for m in mods]
        grid = (pl.cdiv(rows, tl),)
        out_shape2d = jax.ShapeDtypeStruct((rows, nd), dtype)
        out_spec = pl.BlockSpec((tl, nd), lambda r: (r, 0))

        # Pure memory traffic: read N*R*D, write R*N*D.
        cost = pl.CostEstimate(flops=0, transcendentals=0,
                               bytes_accessed=2 * rows * nd * itemsize)
        cparams = pltpu.CompilerParams(
            dimension_semantics=("parallel",),
            vmem_limit_bytes=vmem_limit,
        )

        if rows % tl == 0:
            # Every tile is full: skip the input-VMEM round trip entirely.
            kernel = _make_dma_concat_kernel(n, tl, D)
            fused2d = pl.pallas_call(
                kernel,
                out_shape=out_shape2d,
                grid=grid,
                in_specs=[pl.BlockSpec(memory_space=pl.ANY)] * n,
                out_specs=out_spec,
                scratch_shapes=[pltpu.SemaphoreType.DMA((n,))],
                compiler_params=cparams,
                cost_estimate=cost,
            )(*mods2d)
        else:
            # Ragged row count: let Pallas' auto-pipelined boundary handling
            # deal with the partial last block; stores stay lane-aligned.
            fused2d = pl.pallas_call(
                _concat_copy_kernel,
                out_shape=out_shape2d,
                grid=grid,
                in_specs=[pl.BlockSpec((tl, D), lambda r: (r, 0))
                          for _ in range(n)],
                out_specs=out_spec,
                compiler_params=cparams,
                cost_estimate=cost,
            )(*mods2d)

        return fused2d.reshape(B, L, nd)

    def __call__(self, *mods, lengths=None):
        # Mirrors BaseFuser.forward: fused = self.fuse(*mods, lengths=lengths)
        return self.fuse(*mods, lengths=lengths)


# --------------------------------------------------------------------------
# Demo / correctness checks
# --------------------------------------------------------------------------
if __name__ == "__main__":
    root_key = jax.random.PRNGKey(0)

    def run_case(B, L, D, n_mod, dtype=jnp.float32):
        case_key = jax.random.fold_in(root_key, B * 1009 + L * 131 + D * 7 + n_mod)
        keys = jax.random.split(case_key, n_mod)
        mods = [jax.random.normal(k, (B, L, D), dtype=dtype) for k in keys]
        fuser = BaseFuserPallas(feature_size=D, n_modalities=n_mod)
        out = jax.block_until_ready(fuser(*mods, lengths=None))
        ref = jnp.concatenate(mods, axis=-1)
        assert out.shape == (B, L, fuser.out_size)
        assert bool(jnp.array_equal(out, ref)), (
            f"mismatch vs reference concat for B={B} L={L} D={D} N={n_mod}")

    # 1) Lane-aligned D, rows divisible by the chosen tile -> manual-DMA path.
    run_case(B=2, L=16, D=128, n_mod=3)
    # 2) Lane-aligned D, ragged row count -> auto-pipelined slice-store path.
    run_case(B=3, L=20, D=128, n_mod=2)
    # 3) Small / non-128-multiple feature size -> XLA concat fallback.
    run_case(B=2, L=8, D=32, n_mod=3)

    print("KERNEL_OK")
</pallas_src>

<mosaic_0001>
module attributes {stable_mosaic.version = 11 : i64} {
  func.func @kernel(%arg0: i32, %arg1: memref<32x128xf32, #tpu.memory_space<any>>, %arg2: memref<32x128xf32, #tpu.memory_space<any>>, %arg3: memref<32x128xf32, #tpu.memory_space<any>>, %arg4: memref<8x384xf32, #tpu.memory_space<vmem>>, %arg5: memref<3x!tpu.dma_semaphore, #tpu.memory_space<semaphore_mem>>) attributes {dimension_semantics = [#tpu.dimension_semantics<parallel>], iteration_bounds = array<i64: 4>, scalar_prefetch = 0 : i64, scratch_operands = 1 : i64, tpu.core_type = #tpu.core_type<tc>, window_params = [{}, {}, {}, {transform_indices = @transform_3, window_bounds = array<i64: 8, 384>}]} {
    %c8_i32 = arith.constant 8 : i32
    %0 = arith.muli %arg0, %c8_i32 : i32
    %1 = tpu.assume_multiple %0, 8 : i32
    %c0_i32 = arith.constant 0 : i32
    %c0_i32_0 = arith.constant 0 : i32
    %2 = tpu.memref_slice %arg1[%1, %c0_i32_0] : memref<32x128xf32, #tpu.memory_space<any>> -> memref<8x128xf32, #tpu.memory_space<any>>
    %c0_i32_1 = arith.constant 0 : i32
    %c0_i32_2 = arith.constant 0 : i32
    %3 = tpu.memref_slice %arg4[%c0_i32_1, %c0_i32_2] : memref<8x384xf32, #tpu.memory_space<vmem>> -> memref<8x128xf32, #tpu.memory_space<vmem>>
    %4 = tpu.memref_slice %arg5[%c0_i32] : memref<3x!tpu.dma_semaphore, #tpu.memory_space<semaphore_mem>> -> memref<1x!tpu.dma_semaphore, #tpu.memory_space<semaphore_mem>>
    %5 = tpu.memref_squeeze %4 : memref<1x!tpu.dma_semaphore, #tpu.memory_space<semaphore_mem>> -> memref<!tpu.dma_semaphore, #tpu.memory_space<semaphore_mem>>
    tpu.enqueue_dma source(%2 : memref<8x128xf32, #tpu.memory_space<any>>) target(%3 : memref<8x128xf32, #tpu.memory_space<vmem>>) target_semaphore(%5 : memref<!tpu.dma_semaphore, #tpu.memory_space<semaphore_mem>>)
    %c1_i32 = arith.constant 1 : i32
    %c0_i32_3 = arith.constant 0 : i32
    %6 = tpu.memref_slice %arg2[%1, %c0_i32_3] : memref<32x128xf32, #tpu.memory_space<any>> -> memref<8x128xf32, #tpu.memory_space<any>>
    %c0_i32_4 = arith.constant 0 : i32
    %c128_i32 = arith.constant 128 : i32
    %7 = tpu.memref_slice %arg4[%c0_i32_4, %c128_i32] : memref<8x384xf32, #tpu.memory_space<vmem>> -> memref<8x128xf32, #tpu.memory_space<vmem>>
    %8 = tpu.memref_slice %arg5[%c1_i32] : memref<3x!tpu.dma_semaphore, #tpu.memory_space<semaphore_mem>> -> memref<1x!tpu.dma_semaphore, #tpu.memory_space<semaphore_mem>>
    %9 = tpu.memref_squeeze %8 : memref<1x!tpu.dma_semaphore, #tpu.memory_space<semaphore_mem>> -> memref<!tpu.dma_semaphore, #tpu.memory_space<semaphore_mem>>
    tpu.enqueue_dma source(%6 : memref<8x128xf32, #tpu.memory_space<any>>) target(%7 : memref<8x128xf32, #tpu.memory_space<vmem>>) target_semaphore(%9 : memref<!tpu.dma_semaphore, #tpu.memory_space<semaphore_mem>>)
    %c2_i32 = arith.constant 2 : i32
    %c0_i32_5 = arith.constant 0 : i32
    %10 = tpu.memref_slice %arg3[%1, %c0_i32_5] : memref<32x128xf32, #tpu.memory_space<any>> -> memref<8x128xf32, #tpu.memory_space<any>>
    %c0_i32_6 = arith.constant 0 : i32
    %c256_i32 = arith.constant 256 : i32
    %11 = tpu.memref_slice %arg4[%c0_i32_6, %c256_i32] : memref<8x384xf32, #tpu.memory_space<vmem>> -> memref<8x128xf32, #tpu.memory_space<vmem>>
    %12 = tpu.memref_slice %arg5[%c2_i32] : memref<3x!tpu.dma_semaphore, #tpu.memory_space<semaphore_mem>> -> memref<1x!tpu.dma_semaphore, #tpu.memory_space<semaphore_mem>>
    %13 = tpu.memref_squeeze %12 : memref<1x!tpu.dma_semaphore, #tpu.memory_space<semaphore_mem>> -> memref<!tpu.dma_semaphore, #tpu.memory_space<semaphore_mem>>
    tpu.enqueue_dma source(%10 : memref<8x128xf32, #tpu.memory_space<any>>) target(%11 : memref<8x128xf32, #tpu.memory_space<vmem>>) target_semaphore(%13 : memref<!tpu.dma_semaphore, #tpu.memory_space<semaphore_mem>>)
    %c0_i32_7 = arith.constant 0 : i32
    %c0_i32_8 = arith.constant 0 : i32
    %14 = tpu.memref_slice %arg1[%1, %c0_i32_8] : memref<32x128xf32, #tpu.memory_space<any>> -> memref<8x128xf32, #tpu.memory_space<any>>
    %c0_i32_9 = arith.constant 0 : i32
    %c0_i32_10 = arith.constant 0 : i32
    %15 = tpu.memref_slice %arg4[%c0_i32_9, %c0_i32_10] : memref<8x384xf32, #tpu.memory_space<vmem>> -> memref<8x128xf32, #tpu.memory_space<vmem>>
    %16 = tpu.memref_slice %arg5[%c0_i32_7] : memref<3x!tpu.dma_semaphore, #tpu.memory_space<semaphore_mem>> -> memref<1x!tpu.dma_semaphore, #tpu.memory_space<semaphore_mem>>
    %17 = tpu.memref_squeeze %16 : memref<1x!tpu.dma_semaphore, #tpu.memory_space<semaphore_mem>> -> memref<!tpu.dma_semaphore, #tpu.memory_space<semaphore_mem>>
    tpu.wait_dma2 semaphore(%17 : memref<!tpu.dma_semaphore, #tpu.memory_space<semaphore_mem>>) src(%14 : memref<8x128xf32, #tpu.memory_space<any>>) dst(%15 : memref<8x128xf32, #tpu.memory_space<vmem>>)
    %c1_i32_11 = arith.constant 1 : i32
    %c0_i32_12 = arith.constant 0 : i32
    %18 = tpu.memref_slice %arg2[%1, %c0_i32_12] : memref<32x128xf32, #tpu.memory_space<any>> -> memref<8x128xf32, #tpu.memory_space<any>>
    %c0_i32_13 = arith.constant 0 : i32
    %c128_i32_14 = arith.constant 128 : i32
    %19 = tpu.memref_slice %arg4[%c0_i32_13, %c128_i32_14] : memref<8x384xf32, #tpu.memory_space<vmem>> -> memref<8x128xf32, #tpu.memory_space<vmem>>
    %20 = tpu.memref_slice %arg5[%c1_i32_11] : memref<3x!tpu.dma_semaphore, #tpu.memory_space<semaphore_mem>> -> memref<1x!tpu.dma_semaphore, #tpu.memory_space<semaphore_mem>>
    %21 = tpu.memref_squeeze %20 : memref<1x!tpu.dma_semaphore, #tpu.memory_space<semaphore_mem>> -> memref<!tpu.dma_semaphore, #tpu.memory_space<semaphore_mem>>
    tpu.wait_dma2 semaphore(%21 : memref<!tpu.dma_semaphore, #tpu.memory_space<semaphore_mem>>) src(%18 : memref<8x128xf32, #tpu.memory_space<any>>) dst(%19 : memref<8x128xf32, #tpu.memory_space<vmem>>)
    %c2_i32_15 = arith.constant 2 : i32
    %c0_i32_16 = arith.constant 0 : i32
    %22 = tpu.memref_slice %arg3[%1, %c0_i32_16] : memref<32x128xf32, #tpu.memory_space<any>> -> memref<8x128xf32, #tpu.memory_space<any>>
    %c0_i32_17 = arith.constant 0 : i32
    %c256_i32_18 = arith.constant 256 : i32
    %23 = tpu.memref_slice %arg4[%c0_i32_17, %c256_i32_18] : memref<8x384xf32, #tpu.memory_space<vmem>> -> memref<8x128xf32, #tpu.memory_space<vmem>>
    %24 = tpu.memref_slice %arg5[%c2_i32_15] : memref<3x!tpu.dma_semaphore, #tpu.memory_space<semaphore_mem>> -> memref<1x!tpu.dma_semaphore, #tpu.memory_space<semaphore_mem>>
    %25 = tpu.memref_squeeze %24 : memref<1x!tpu.dma_semaphore, #tpu.memory_space<semaphore_mem>> -> memref<!tpu.dma_semaphore, #tpu.memory_space<semaphore_mem>>
    tpu.wait_dma2 semaphore(%25 : memref<!tpu.dma_semaphore, #tpu.memory_space<semaphore_mem>>) src(%22 : memref<8x128xf32, #tpu.memory_space<any>>) dst(%23 : memref<8x128xf32, #tpu.memory_space<vmem>>)
    return
  }
  func.func @transform_3(%arg0: i32) -> (i32, i32) {
    %c0_i32 = arith.constant 0 : i32
    %c0_i32_0 = arith.constant 0 : i32
    return %arg0, %c0_i32 : i32, i32
  }
}

</mosaic_0001>

<llo_original>
// kernel: tpu_custom_call.1
$region0: #{tpu_custom_call.1}
  #allocation0 [shape = 'u32[]', space=smem, size = 0x4, offset = 0x4, fixed_abs, tag = 'smem constant byte address 0x4 - core index']
  #allocation1 [shape = 'u32[144,128]{1,0:T(1,128)}', space=vmem, size = 0x12000, scoped, tag = 'internal scratch']
  #allocation2 [shape = 's32[3]{0}', space=sflag, size = 0xc, scoped, tag = 'scratch operand']
  #allocation5 [shape = 's32[]', space=sflag, size = 0x4, offset = 0, fixed_abs, tag = 'sflag constant byte address 0x0 - dummy sync flag']
  #allocation6 [shape = 's32[]', space=sflag, size = 0x4, offset = 0, fixed_abs, tag = 'sflag constant byte address 0x0 - dummy sync flag']
  #allocation7 [shape = 'u32[]', space=smem, size = 0x4, offset = 0x44, fixed_abs, tag = 'smem constant byte address 0x44 - assertion arg 0']
  #allocation8 [shape = 'u32[]', space=smem, size = 0x4, offset = 0x48, fixed_abs, tag = 'smem constant byte address 0x48 - assertion arg 1']
  #allocation9 [shape = 's32[]', space=sflag, size = 0x4, offset = 0, fixed_abs, tag = 'sflag constant byte address 0x0 - dummy sync flag']
  #allocation10 [shape = 's32[]', space=sflag, size = 0x4, offset = 0, fixed_abs, tag = 'sflag constant byte address 0x0 - dummy sync flag']
  #allocation11 [shape = 's32[]', space=sflag, size = 0x4, offset = 0, fixed_abs, tag = 'sflag constant byte address 0x0 - dummy sync flag']
  #allocation12 [shape = 's32[]', space=sflag, size = 0x4, offset = 0, fixed_abs, tag = 'sflag constant byte address 0x0 - dummy sync flag']
  %s0 = inlined_call_operand.hbm [shape: f32[32,128], index: 0, kind: input, shape index: {}]
  %s1 = inlined_call_operand.hbm [shape: f32[32,128], index: 1, kind: input, shape index: {}]
  %s2 = inlined_call_operand.hbm [shape: f32[32,128], index: 2, kind: input, shape index: {}]
  %s3 = inlined_call_operand.hbm [shape: f32[32,384], index: 3, kind: output, shape index: {}]
  %s4 = sld [smem:[#allocation0]]
  $region37: #{tpu_custom_call.1} parent=0
    _
  %s6 = ssub.s32 1, %s4
  %s7 = scalar_select 0, %s6, %s4
  $region1: #{tpu_custom_call.1} parent=0
    #allocation3 [shape = 'u8[24576]{0}', space=vmem, size = 0x6000, scoped, tag = 'output window, operand 0']
    #allocation4 [shape = 's32[2]{0}', space=sflag, size = 0x8, scoped, tag = 'scoped memory for tpu_custom_call.1']
    %8 = vsyncpa [#allocation4], 0
    %s9 = scalar_lea.sflag [#allocation4], 1
    %10 = vsyncpa %s9, 0
    loop: start=0, step=1, limit=5
    $region2: #{tpu_custom_call.1} parent=1 // loop_pre_header
      _
    $region3: #{tpu_custom_call.1} parent=1 // loop_header
      %s12 = sphi 0, %s16
      %p13 = scmp.ge.s32.totalorder %s12, 5
      %s21 = sphi 0, %s23
      %s24 = sphi 0, %s21
      %s34 = sphi 0, %s24
    $region4: #{tpu_custom_call.1} parent=1 // loop_header_branch
      %15 = sbr.rel (%p13) target = $region8
    $region5: #{tpu_custom_call.1} parent=1 // loop_body
      %s17 = ssub.s32 %s12, 1
      %s18 = sadd.s32 %s12, 1
      %s19 = ssub.s32 %s12, %s18
      %p20 = scmp.eq.s32.totalorder %s19, 0
      %s22 = sadd.s32 %s21, 1
      %s23 = scalar_select %p20, %s21, %s22
      %p25 = pneg %p20
      %p26 = scmp.eq.s32.totalorder %s12, 3
      %p27 = por %p25, %p26
      %p28 = scmp.ne.s32.totalorder %s21, %s24
      %p29 = scmp.eq.s32.totalorder %s12, 0
      %p30 = por %p28, %p29
      %p31 = scmp.ne.s32.totalorder %s21, %s24
      %p32 = scmp.eq.s32.totalorder %s17, 3
      %p33 = por %p31, %p32
      %p35 = scmp.ne.s32.totalorder %s24, %s34
      %p36 = scmp.eq.s32.totalorder %s17, 0
      %p37 = por %p35, %p36
      %p38 = scmp.lt.s32.totalorder %s12, 4
      // Predicated region
      $region9: #{tpu_custom_call.1} parent=5 // pred_check
        %p39 = pneg %p38
      $region10: #{tpu_custom_call.1} parent=5 // pred_check_branch
        %41 = sbr.rel (%p39) target = $region12
      $region11: #{tpu_custom_call.1} parent=5 // pred_region
        %p42 = pneg %p30
        %p43 = pneg %p27
        %s44 = sand.u32 %s21, 1
        %s45 = scalar_lea.sflag [#allocation4], %s44
        %s46 = sand.u32 %s21, 1
        %s47 = smul.addr %s46, 24
        %s48 = scalar_lea.vmem [#allocation3], %s47
        %s49 = smul.u32 %s12, 8
        %s50 = smul.addr %s49, 16
        %s51 = scalar_lea.hbm %s0, %s50
        // Predicated region
        $region13: #{tpu_custom_call.1} parent=11 // pred_check
          _
        $region14: #{tpu_custom_call.1} parent=11 // pred_check_branch
          %53 = sbr.rel target = $region16
        $region15: #{tpu_custom_call.1} parent=11 // pred_region
          %54 = sst [smem:[#allocation7]] [#allocation6]
          %55 = sst [smem:[#allocation8]] [#allocation5]
        $region16: #{tpu_custom_call.1} parent=11 // pred_fallthru
          _
        %57 = shalt.err (0)
        %s59 = sshll.u32 %s48, 4
        %s60 = int_to_ptr.vmem [resolvable:$true] %s59
        %62 = dma.hbm_to_vmem [thread:$0]  %s51, 128, %s60, [#allocation2]
        %s63 = smul.addr %s49, 16
        %s64 = scalar_lea.hbm %s1, %s63
        %s65 = scalar_lea.vmem %s48, 8 [#allocation3]
        %s66 = scalar_lea.sflag [#allocation2], 1
        // Predicated region
        $region17: #{tpu_custom_call.1} parent=11 // pred_check
          _
        $region18: #{tpu_custom_call.1} parent=11 // pred_check_branch
          %68 = sbr.rel target = $region20
        $region19: #{tpu_custom_call.1} parent=11 // pred_region
          %69 = sst [smem:[#allocation7]] [#allocation10]
          %70 = sst [smem:[#allocation8]] [#allocation9]
        $region20: #{tpu_custom_call.1} parent=11 // pred_fallthru
          _
        %72 = shalt.err (0)
        %s74 = sshll.u32 %s65, 4
        %s75 = int_to_ptr.vmem [resolvable:$true] %s74
        %77 = dma.hbm_to_vmem [thread:$0]  %s64, 128, %s75, %s66
        %s78 = smul.addr %s49, 16
        %s79 = scalar_lea.hbm %s2, %s78
        %s80 = scalar_lea.vmem %s48, 16 [#allocation3]
        %s81 = scalar_lea.sflag [#allocation2], 2
        // Predicated region
        $region21: #{tpu_custom_call.1} parent=11 // pred_check
          _
        $region22: #{tpu_custom_call.1} parent=11 // pred_check_branch
          %83 = sbr.rel target = $region24
        $region23: #{tpu_custom_call.1} parent=11 // pred_region
          %84 = sst [smem:[#allocation7]] [#allocation12]
          %85 = sst [smem:[#allocation8]] [#allocation11]
        $region24: #{tpu_custom_call.1} parent=11 // pred_fallthru
          _
        %87 = shalt.err (0)
        %s89 = sshll.u32 %s80, 4
        %s90 = int_to_ptr.vmem [resolvable:$true] %s89
        %92 = dma.hbm_to_vmem [thread:$0]  %s79, 128, %s90, %s81
        %s93 = smul.u32 8, 1
        %s94 = smul.u32 %s93, 1
        %s95 = sshll.u32 %s94, 4
        %96 = dma.done [#allocation2], %s95
        %s97 = sshll.u32 %s94, 4
        %98 = dma.done %s66, %s97
        %s99 = sshll.u32 %s94, 4
        %100 = dma.done %s81, %s99
        %s101 = sand.u32 %s21, 1
        %s102 = scalar_lea.sflag [#allocation4], %s101
        %s103 = sand.u32 %s21, 1
        %s104 = smul.addr %s103, 24
        %s105 = scalar_lea.vmem [#allocation3], %s104
        // Predicated region
        $region25: #{tpu_custom_call.1} parent=11 // pred_check
          %p106 = pneg %p27
        $region26: #{tpu_custom_call.1} parent=11 // pred_check_branch
          %108 = sbr.rel (%p106) target = $region28
        $region27: #{tpu_custom_call.1} parent=11 // pred_region
          %s110 = ssub.s32 384, 384
          %111 = vsyncadd %s102, %s110
          %s112 = smul.addr %s12, 3
          %s113 = smul.addr %s112, 128
          %s114 = scalar_lea.hbm %s3, %s113
          %s116 = sshll.u32 %s105, 4
          %s117 = int_to_ptr.vmem [resolvable:$true] %s116
          %119 = dma.vmem_to_hbm [thread:$0]  %s117, 384, %s114, %s102
        $region28: #{tpu_custom_call.1} parent=11 // pred_fallthru
          _
      $region12: #{tpu_custom_call.1} parent=5 // pred_fallthru
        _
      %p120 = scmp.le.s32.totalorder 1, %s12
      // Predicated region
      $region29: #{tpu_custom_call.1} parent=5 // pred_check
        %p121 = pneg %p120
      $region30: #{tpu_custom_call.1} parent=5 // pred_check_branch
        %123 = sbr.rel (%p121) target = $region32
      $region31: #{tpu_custom_call.1} parent=5 // pred_region
        %s124 = ssub.s32 %s12, 1
        // Predicated region
        $region33: #{tpu_custom_call.1} parent=31 // pred_check
          %p125 = pneg %p33
        $region34: #{tpu_custom_call.1} parent=31 // pred_check_branch
          %127 = sbr.rel (%p125) target = $region36
        $region35: #{tpu_custom_call.1} parent=31 // pred_region
          %s128 = sand.u32 %s24, 1
          %s129 = scalar_lea.sflag [#allocation4], %s128
          %s130 = sand.u32 %s24, 1
          %s131 = smul.addr %s130, 24
          %s132 = scalar_lea.vmem [#allocation3], %s131
          %133 = dma.done %s129, 384
        $region36: #{tpu_custom_call.1} parent=31 // pred_fallthru
          _
      $region32: #{tpu_custom_call.1} parent=5 // pred_fallthru
        _
    $region6: #{tpu_custom_call.1} parent=1 // loop_footer
      %s16 = sadd.s32 1, %s12
    $region7: #{tpu_custom_call.1} parent=1 // loop_footer_branch
      %11 = sbr.rel target = $region3
    $region8: #{tpu_custom_call.1} parent=1 // loop_exit
      _
    %134 = vsyncpa [#allocation4], 1
    %s135 = scalar_lea.sflag [#allocation4], 1
    %136 = vsyncpa %s135, 1
  %137 = vsyncmov [#allocation2]
  %s138 = vpop.sfrf %137
  %p139 = scmp.eq.s32.totalorder %s138, 0
  %p140 = pneg %p139
  %142 = shalt.err (%p140)
  %s143 = scalar_lea.sflag [#allocation2], 1
  %144 = vsyncmov %s143
  %s145 = vpop.sfrf %144
  %p146 = scmp.eq.s32.totalorder %s145, 0
  %p147 = pneg %p146
  %149 = shalt.err (%p147)
  %s150 = scalar_lea.sflag [#allocation2], 2
  %151 = vsyncmov %s150
  %s152 = vpop.sfrf %151
  %p153 = scmp.eq.s32.totalorder %s152, 0
  %p154 = pneg %p153
  %156 = shalt.err (%p154)

</llo_original>
